<compile_context>
chip_gen: v6e
topology: v6e:2x2x1
jax: 0.10.0
libtpu: 0.0.40
codegen_flags: <defaults>
</compile_context>

<pallas_src>
import jax
import jax.numpy as jnp
from jax.experimental import pallas as pl
from jax.experimental.pallas import tpu as pltpu


def _round_up(a: int, b: int) -> int:
    return ((a + b - 1) // b) * b


def _shc_kernel(x_ref, s2sh_ref, o_ref):
    # x_ref:    (tm, V)  VMEM tile of flattened input (contraction axis last)
    # s2sh_ref: (V,  C)  full S2SH matrix, resident across all grid steps
    # o_ref:    (tm, C)  output tile
    o_ref[...] = jnp.dot(
        x_ref[...], s2sh_ref[...], preferred_element_type=jnp.float32
    ).astype(o_ref.dtype)


def compute_shc(x, s2sh, *, tm: int = 1024, compute_dtype=None):
    """out = x @ s2sh  with x: [B, Cin, V], s2sh: [V, C] -> [B, Cin, C].

    compute_dtype: optional narrower streaming dtype (e.g. jnp.bfloat16) for
    the operands; accumulation stays f32 and the result is cast back to
    x.dtype.  Default None keeps exact PyTorch f32 semantics.
    """
    B, Cin, V = x.shape
    V2, C = s2sh.shape
    assert V == V2, "contraction dims must match"

    out_dtype = x.dtype
    if compute_dtype is not None:
        x = x.astype(compute_dtype)
        s2sh = s2sh.astype(compute_dtype)

    M = B * Cin
    x2d = x.reshape(M, V)

    # --- choose the M tile -------------------------------------------------
    # Multiple of 8 (sublane), no larger than the (8-rounded) problem size.
    m8 = _round_up(M, 8)
    tm = min(_round_up(tm, 8), m8)
    # Megacore split: only worth it when each half is still a big tile
    # (>= 512 rows).  On single-TC parts (v5e/v6e) this costs at most one
    # extra grid step; on v7x it lets both TensorCores get work.
    if m8 // tm < 2 and tm >= 1024:
        half = _round_up(m8 // 2, 8)
        if half >= 512:
            tm = half

    grid = (pl.cdiv(M, tm),)  # ragged last block handled by Pallas (masked writeback)

    itemsize = jnp.dtype(x2d.dtype).itemsize
    cost = pl.CostEstimate(
        flops=2 * M * V * C,
        transcendentals=0,
        bytes_accessed=itemsize * (M * V + V * C) + jnp.dtype(out_dtype).itemsize * M * C,
    )

    out2d = pl.pallas_call(
        _shc_kernel,
        out_shape=jax.ShapeDtypeStruct((M, C), out_dtype),
        grid_spec=pltpu.PrefetchScalarGridSpec(
            num_scalar_prefetch=0,
            grid=grid,
            in_specs=[
                # x tile: full contraction axis V, tiled over M.
                pl.BlockSpec((tm, V), lambda i: (i, 0)),
                # S2SH: grid-invariant -> fetched once, resident in VMEM.
                pl.BlockSpec((V, C), lambda i: (0, 0)),
            ],
            out_specs=pl.BlockSpec((tm, C), lambda i: (i, 0)),
        ),
        compiler_params=pltpu.CompilerParams(
            dimension_semantics=("parallel",),
        ),
        cost_estimate=cost,
    )(x2d, s2sh)

    return out2d.reshape(B, Cin, C)


if __name__ == "__main__":
    key = jax.random.PRNGKey(0)
    kx, ks, kx2 = jax.random.split(key, 3)

    # Small, forward-implied shapes: B=2, in_channels=4, V=128 directions,
    # C=16 spherical-harmonic coefficients.
    B, Cin, V, C = 2, 4, 128, 16
    x = jax.random.normal(kx, (B, Cin, V), dtype=jnp.float32)
    S2SH = jax.random.normal(ks, (V, C), dtype=jnp.float32)  # registered buffer in torch

    out = compute_shc(x, S2SH)
    out = jax.block_until_ready(out)
    ref = jnp.matmul(x, S2SH)
    assert out.shape == (B, Cin, C)
    assert jnp.allclose(out, ref, atol=1e-5, rtol=1e-5)

    # Second case: M = B*Cin not a multiple of 8 -> exercises the ragged
    # (un-padded) last-block path.
    B2, Cin2 = 3, 5
    x2 = jax.random.normal(kx2, (B2, Cin2, V), dtype=jnp.float32)
    out2 = jax.block_until_ready(compute_shc(x2, S2SH))
    ref2 = jnp.matmul(x2, S2SH)
    assert out2.shape == (B2, Cin2, C)
    assert jnp.allclose(out2, ref2, atol=1e-5, rtol=1e-5)

    print("KERNEL_OK")
</pallas_src>

<mosaic_0001>
module attributes {stable_mosaic.version = 11 : i64} {
  func.func @_shc_kernel(%arg0: i32, %arg1: memref<8x128xf32, #tpu.memory_space<vmem>>, %arg2: memref<128x16xf32, #tpu.memory_space<vmem>>, %arg3: memref<8x16xf32, #tpu.memory_space<vmem>>) attributes {dimension_semantics = [#tpu.dimension_semantics<parallel>], iteration_bounds = array<i64: 1>, scalar_prefetch = 0 : i64, scratch_operands = 0 : i64, tpu.core_type = #tpu.core_type<tc>, window_params = [{transform_indices = @transform_0, window_bounds = array<i64: 8, 128>}, {pipeline_mode = #tpu.pipeline_mode<synchronous>, transform_indices = @transform_1, window_bounds = array<i64: 128, 16>}, {transform_indices = @transform_2, window_bounds = array<i64: 8, 16>}]} {
    %c0 = arith.constant 0 : index
    %c0_0 = arith.constant 0 : index
    %0 = vector.load %arg1[%c0, %c0_0] : memref<8x128xf32, #tpu.memory_space<vmem>>, vector<8x128xf32>
    %c0_1 = arith.constant 0 : index
    %c0_2 = arith.constant 0 : index
    %1 = vector.load %arg2[%c0_1, %c0_2] : memref<128x16xf32, #tpu.memory_space<vmem>>, vector<128x16xf32>
    %cst = arith.constant dense<0.000000e+00> : vector<8x16xf32>
    %2 = tpu.matmul %0, %1, %cst {dimension_numbers = #tpu.dot_dimension_numbers<[1], [0], [0], [1], [0, 0, 1, 1], [], []>} : vector<8x128xf32>, vector<128x16xf32>, vector<8x16xf32> -> vector<8x16xf32>
    %c0_3 = arith.constant 0 : index
    %c0_4 = arith.constant 0 : index
    %3 = vector.load %arg3[%c0_3, %c0_4] : memref<8x16xf32, #tpu.memory_space<vmem>>, vector<8x16xf32>
    tpu.vector_store %arg3[%c0_3, %c0_4], %2 {strides = array<i32>} : memref<8x16xf32, #tpu.memory_space<vmem>>, vector<8x16xf32>,
    return
  }
  func.func @transform_0(%arg0: i32) -> (i32, i32) {
    %c0_i32 = arith.constant 0 : i32
    %c0_i32_0 = arith.constant 0 : i32
    return %arg0, %c0_i32 : i32, i32
  }
  func.func @transform_1(%arg0: i32) -> (i32, i32) {
    %c0_i32 = arith.constant 0 : i32
    %c0_i32_0 = arith.constant 0 : i32
    %c0_i32_1 = arith.constant 0 : i32
    return %c0_i32, %c0_i32_0 : i32, i32
  }
  func.func @transform_2(%arg0: i32) -> (i32, i32) {
    %c0_i32 = arith.constant 0 : i32
    %c0_i32_0 = arith.constant 0 : i32
    return %arg0, %c0_i32 : i32, i32
  }
}

</mosaic_0001>

<llo_original>
// kernel: tpu_custom_call.1
$region0: #{tpu_custom_call.1}
  #allocation0 [shape = 'u32[]', space=smem, size = 0x4, offset = 0x4, fixed_abs, tag = 'smem constant byte address 0x4 - core index']
  #allocation1 [shape = 'u32[144,128]{1,0:T(1,128)}', space=vmem, size = 0x12000, scoped, tag = 'internal scratch']
  %s0 = inlined_call_operand.vmem [shape: f32[8,128], index: 0, kind: input, shape index: {}]
  %s1 = inlined_call_operand.vmem [shape: f32[128,16], index: 1, kind: input, shape index: {}]
  %s2 = inlined_call_operand.hbm [shape: f32[8,16], index: 2, kind: output, shape index: {}]
  %s3 = sld [smem:[#allocation0]]
  $region18: #{tpu_custom_call.1} parent=0
    _
  %s5 = ssub.s32 1, %s3
  %s6 = scalar_select 0, %s5, %s3
  $region1: #{tpu_custom_call.1} parent=0
    #allocation2 [shape = 'u8[4096]{0}', space=vmem, size = 0x1000, scoped, tag = 'output window, operand 0, single buffered']
    #allocation3 [shape = 's32[1]{0}', space=sflag, size = 0x4, scoped, tag = 'scoped memory for tpu_custom_call.1']
    %7 = vsyncpa [#allocation3], 0
    // Predicated region
    $region2: #{tpu_custom_call.1} parent=1 // pred_check
      _
    $region3: #{tpu_custom_call.1} parent=1 // pred_check_branch
      %9 = sbr.rel (0) target = $region5
    $region4: #{tpu_custom_call.1} parent=1 // pred_region
      _
    $region5: #{tpu_custom_call.1} parent=1 // pred_fallthru
      _
    // Predicated region
    $region6: #{tpu_custom_call.1} parent=1 // pred_check
      _
    $region7: #{tpu_custom_call.1} parent=1 // pred_check_branch
      %11 = sbr.rel (0) target = $region9
    $region8: #{tpu_custom_call.1} parent=1 // pred_region
      _
    $region9: #{tpu_custom_call.1} parent=1 // pred_fallthru
      _
    %v12 = vld [vmem:[%s0] sm:$0xff]
    %v13 = vld [vmem:[%s1] sm:$0xff]
    %v14 = vld [vmem:[%s1 + $0x8] sm:$0xff]
    %v15 = vld [vmem:[%s1 + $0x10] sm:$0xff]
    %v16 = vld [vmem:[%s1 + $0x18] sm:$0xff]
    %v17 = vld [vmem:[%s1 + $0x20] sm:$0xff]
    %v18 = vld [vmem:[%s1 + $0x28] sm:$0xff]
    %v19 = vld [vmem:[%s1 + $0x30] sm:$0xff]
    %v20 = vld [vmem:[%s1 + $0x38] sm:$0xff]
    %v21 = vld [vmem:[%s1 + $0x40] sm:$0xff]
    %v22 = vld [vmem:[%s1 + $0x48] sm:$0xff]
    %v23 = vld [vmem:[%s1 + $0x50] sm:$0xff]
    %v24 = vld [vmem:[%s1 + $0x58] sm:$0xff]
    %v25 = vld [vmem:[%s1 + $0x60] sm:$0xff]
    %v26 = vld [vmem:[%s1 + $0x68] sm:$0xff]
    %v27 = vld [vmem:[%s1 + $0x70] sm:$0xff]
    %v28 = vld [vmem:[%s1 + $0x78] sm:$0xff]
    %29 = vmatprep.subr.mxu0 0.0
    %30 = vmatpush1.msra.mxu0 %v28
    %31 = vmatprep.subr.mxu0 0.0
    %32 = vmatpush1.msra.mxu0 %v27
    %33 = vmatprep.subr.mxu0 0.0
    %34 = vmatpush1.msra.mxu0 %v26
    %35 = vmatprep.subr.mxu0 0.0
    %36 = vmatpush1.msra.mxu0 %v25
    %37 = vmatprep.subr.mxu0 0.0
    %38 = vmatpush1.msra.mxu0 %v24
    %39 = vmatprep.subr.mxu0 0.0
    %40 = vmatpush1.msra.mxu0 %v23
    %41 = vmatprep.subr.mxu0 0.0
    %42 = vmatpush1.msra.mxu0 %v22
    %43 = vmatprep.subr.mxu0 0.0
    %44 = vmatpush1.msra.mxu0 %v21
    %45 = vmatprep.subr.mxu0 0.0
    %46 = vmatpush1.msra.mxu0 %v20
    %47 = vmatprep.subr.mxu0 0.0
    %48 = vmatpush1.msra.mxu0 %v19
    %49 = vmatprep.subr.mxu0 0.0
    %50 = vmatpush1.msra.mxu0 %v18
    %51 = vmatprep.subr.mxu0 0.0
    %52 = vmatpush1.msra.mxu0 %v17
    %53 = vmatprep.subr.mxu0 0.0
    %54 = vmatpush1.msra.mxu0 %v16
    %55 = vmatprep.subr.mxu0 0.0
    %56 = vmatpush1.msra.mxu0 %v15
    %57 = vmatprep.subr.mxu0 0.0
    %58 = vmatpush1.msra.mxu0 %v14
    %59 = vmatprep.subr.mxu0 0.0
    %60 = vmatpush1.msra.mxu0 %v13
    %61 = vmatprep.subr.mxu0 0.0
    %62 = vmatpush2.msra.mxu0 0.0
    %63 = vmatprep.subr.mxu0 0.0
    %64 = vmatpush2.msra.mxu0 0.0
    %65 = vmatprep.subr.mxu0 0.0
    %66 = vmatpush2.msra.mxu0 0.0
    %67 = vmatprep.subr.mxu0 0.0
    %68 = vmatpush2.msra.mxu0 0.0
    %69 = vmatprep.subr.mxu0 0.0
    %70 = vmatpush2.msra.mxu0 0.0
    %71 = vmatprep.subr.mxu0 0.0
    %72 = vmatpush2.msra.mxu0 0.0
    %73 = vmatprep.subr.mxu0 0.0
    %74 = vmatpush2.msra.mxu0 0.0
    %75 = vmatprep.subr.mxu0 0.0
    %76 = vmatpush2.msra.mxu0 0.0
    %77 = vmatprep.subr.mxu0 0.0
    %78 = vmatpush2.msra.mxu0 0.0
    %79 = vmatprep.subr.mxu0 0.0
    %80 = vmatpush2.msra.mxu0 0.0
    %81 = vmatprep.subr.mxu0 0.0
    %82 = vmatpush2.msra.mxu0 0.0
    %83 = vmatprep.subr.mxu0 0.0
    %84 = vmatpush2.msra.mxu0 0.0
    %85 = vmatprep.subr.mxu0 0.0
    %86 = vmatpush2.msra.mxu0 0.0
    %87 = vmatprep.subr.mxu0 0.0
    %88 = vmatpush2.msra.mxu0 0.0
    %89 = vmatprep.subr.mxu0 0.0
    %90 = vmatpush2.msra.mxu0 0.0
    %91 = vmatprep.subr.mxu0 0.0
    %92 = vmatpush2.msra.mxu0 0.0
    %93 = vmatprep.mubr.f32.mxu0 0.0
    %94 = vmatmul.mubr.f32.gmra.mxu0 %v12
    %v95 = vpop.f32.mrf.mxu0
    %v96 = vadd.f32 0.0, %v95
    %v97 = vpop.f32.mrf.mxu0
    %98 = vdwg.mxu0
    %vm99 = vcmask 130048
    %100 = vst.msk [vmem:[#allocation2] sm:$0xff] %vm99, %v96
    // Predicated region
    $region10: #{tpu_custom_call.1} parent=1 // pred_check
      _
    $region11: #{tpu_custom_call.1} parent=1 // pred_check_branch
      %102 = sbr.rel (0) target = $region13
    $region12: #{tpu_custom_call.1} parent=1 // pred_region
      %s104 = ssub.s32 128, 128
      %105 = vsyncadd [#allocation3], %s104
      %s107 = sshll.u32 [#allocation2], 4
      %s108 = int_to_ptr.vmem [resolvable:$true] %s107
      %110 = dma.vmem_to_hbm [thread:$0]  %s108, 128, %s2, [#allocation3]
    $region13: #{tpu_custom_call.1} parent=1 // pred_fallthru
      _
    // Predicated region
    $region14: #{tpu_custom_call.1} parent=1 // pred_check
      _
    $region15: #{tpu_custom_call.1} parent=1 // pred_check_branch
      %112 = sbr.rel (0) target = $region17
    $region16: #{tpu_custom_call.1} parent=1 // pred_region
      %113 = dma.done [#allocation3], 128
    $region17: #{tpu_custom_call.1} parent=1 // pred_fallthru
      _
    %114 = vsyncpa [#allocation3], 1

</llo_original>
